<compile_context>
chip_gen: v6e
topology: v6e:2x2x1
jax: 0.10.0
libtpu: 0.0.40
codegen_flags: <defaults>
</compile_context>

<pallas_src>
import math

import jax
import jax.numpy as jnp
from jax.experimental import pallas as pl
from jax.experimental.pallas import tpu as pltpu


def _round_up(x, m):
    return ((x + m - 1) // m) * m


def _make_actor_kernel(head_slices, a_pad, a_total):
    """head_slices: static tuple of (start, end) lane offsets, one per head."""

    def kernel(x_ref, w1_ref, b1_ref, w2_ref, b2_ref, wh_ref, bh_ref, out_ref):
        x = x_ref[...]
        # Feature extractor: Linear -> ReLU -> Linear -> ReLU (MXU matmuls, VPU relu).
        h1 = jnp.dot(x, w1_ref[...], preferred_element_type=jnp.float32) + b1_ref[...]
        h1 = jnp.maximum(h1, 0.0)
        feat = jnp.dot(h1, w2_ref[...], preferred_element_type=jnp.float32) + b2_ref[...]
        feat = jnp.maximum(feat, 0.0)

        # All heads fused into one lane-padded MXU matmul: (TB,128) @ (128,A_pad).
        logits = jnp.dot(feat, wh_ref[...], preferred_element_type=jnp.float32) + bh_ref[...]

        lane = jax.lax.broadcasted_iota(jnp.int32, (1, a_pad), 1)
        neg_big = jnp.float32(-1e30)

        # Pass 1: per-head max, scattered onto that head's lanes.
        m_lanes = jnp.zeros_like(logits)
        masks = []
        for (s, e) in head_slices:           # static python loop; num_heads is small
            mask_h = (lane >= s) & (lane < e)
            masks.append(mask_h)
            m_h = jnp.max(jnp.where(mask_h, logits, neg_big), axis=-1, keepdims=True)
            m_lanes = m_lanes + jnp.where(mask_h, m_h, 0.0)

        # Single full-slab exp (EUP), hoisted out of the per-head loop.
        p = jnp.exp(logits - m_lanes)

        # Pass 2: per-head masked sum + small log, scattered back onto the head's lanes.
        # (Could be two small MXU matmuls against a one-hot segment matrix for many
        #  heads; with a handful of heads the masked sums are cheaper to keep simple.)
        logsum_lanes = jnp.zeros_like(logits)
        for mask_h in masks:
            s_h = jnp.sum(jnp.where(mask_h, p, 0.0), axis=-1, keepdims=True)
            logsum_lanes = logsum_lanes + jnp.where(mask_h, jnp.log(s_h), 0.0)

        normalized = logits - m_lanes - logsum_lanes
        # Narrow store: only the sum(output_dims) real lanes go back to HBM.
        out_ref[...] = normalized[:, :a_total].astype(out_ref.dtype)

    return kernel


def multi_dimensional_actor_forward(state, params, output_dims, block_b=4096,
                                    out_dtype=jnp.float32):
    """Returns a list of normalized-logits arrays (log-probs), one per output head."""
    w1, b1, w2, b2, wh_flat, bh_flat = params
    output_dims = tuple(int(n) for n in output_dims)
    in_dim = state.shape[1]
    hid = w2.shape[1]                       # padded hidden width (128)
    a_pad = wh_flat.shape[1]                # lane-padded fused head width
    a_total = sum(output_dims)

    # Static per-head lane offsets inside the fused head slab.
    head_slices, s = [], 0
    for n in output_dims:
        head_slices.append((s, s + n))
        s += n
    head_slices = tuple(head_slices)

    # --- Batch tiling -----------------------------------------------------------
    batch = state.shape[0]
    block_b = max(8, (int(block_b) // 8) * 8)      # clamp to a multiple of 8 sublanes
    bp8 = _round_up(batch, 8)
    tb = min(block_b, bp8)
    # Ensure at least 2 grid steps when the batch allows it, so the "parallel" batch
    # axis can be sharded across both TensorCores on v7x (grid=1 idles half the chip).
    if -(-bp8 // tb) < 2 and bp8 >= 16:
        tb = _round_up(-(-bp8 // 2), 8)
    bp = _round_up(batch, tb)
    if bp != batch:
        state = jnp.pad(state, ((0, bp - batch), (0, 0)))
    grid = (bp // tb,)

    kernel = _make_actor_kernel(head_slices, a_pad, a_total)

    flops = 2 * bp * (in_dim * 128 + 128 * hid + hid * a_pad)
    transcendentals = bp * (a_pad + len(head_slices))
    bytes_accessed = 4 * (bp * in_dim + w1.size + b1.size + w2.size + b2.size
                          + wh_flat.size + bh_flat.size) \
        + bp * a_total * jnp.dtype(out_dtype).itemsize

    out = pl.pallas_call(
        kernel,
        out_shape=jax.ShapeDtypeStruct((bp, a_total), out_dtype),
        grid=grid,
        in_specs=[
            pl.BlockSpec((tb, in_dim), lambda i: (i, 0)),      # state: blocked on batch
            pl.BlockSpec((in_dim, 128), lambda i: (0, 0)),     # w1: resident
            pl.BlockSpec((1, 128), lambda i: (0, 0)),          # b1
            pl.BlockSpec((128, hid), lambda i: (0, 0)),        # w2 (hidden padded to 128)
            pl.BlockSpec((1, hid), lambda i: (0, 0)),          # b2
            pl.BlockSpec((hid, a_pad), lambda i: (0, 0)),      # fused head weights
            pl.BlockSpec((1, a_pad), lambda i: (0, 0)),        # fused head biases
        ],
        # Narrow (un-padded) output block: last dim == full array dim, so it is legal
        # and the HBM writeback carries only the real lanes.
        out_specs=pl.BlockSpec((tb, a_total), lambda i: (i, 0)),
        compiler_params=pltpu.CompilerParams(
            dimension_semantics=("parallel",),
            vmem_limit_bytes=48 * 1024 * 1024,
        ),
        cost_estimate=pl.CostEstimate(
            flops=flops, transcendentals=transcendentals, bytes_accessed=bytes_accessed),
    )(state, w1, b1, w2, b2, wh_flat, bh_flat)

    out = out[:batch]
    return [out[:, s0:e0] for (s0, e0) in head_slices]


def init_params(key, input_dim, output_dims):
    """PyTorch-default-style init U(-1/sqrt(fan_in), 1/sqrt(fan_in)); weights stored as
    (fan_in, fan_out).  Hidden dim is zero-padded 64->128 and head weights/biases are
    packed along lanes and zero-padded to a multiple of 128."""
    def lin(key, fan_in, fan_out):
        kw, kb = jax.random.split(key)
        bound = 1.0 / math.sqrt(fan_in)
        w = jax.random.uniform(kw, (fan_in, fan_out), jnp.float32, -bound, bound)
        b = jax.random.uniform(kb, (1, fan_out), jnp.float32, -bound, bound)
        return w, b

    output_dims = tuple(int(n) for n in output_dims)
    keys = jax.random.split(key, 2 + len(output_dims))
    w1, b1 = lin(keys[0], input_dim, 128)

    w2_real, b2_real = lin(keys[1], 128, 64)
    w2 = jnp.zeros((128, 128), jnp.float32).at[:, :64].set(w2_real)
    b2 = jnp.zeros((1, 128), jnp.float32).at[:, :64].set(b2_real)

    a_total = sum(output_dims)
    a_pad = _round_up(a_total, 128)
    wh_flat = jnp.zeros((128, a_pad), jnp.float32)
    bh_flat = jnp.zeros((1, a_pad), jnp.float32)
    off = 0
    for h, n in enumerate(output_dims):
        w, b = lin(keys[2 + h], 64, n)
        wh_flat = wh_flat.at[:64, off:off + n].set(w)
        bh_flat = bh_flat.at[:, off:off + n].set(b)
        off += n
    return (w1, b1, w2, b2, wh_flat, bh_flat)


def _reference_forward(state, params, output_dims):
    w1, b1, w2, b2, wh_flat, bh_flat = params
    feat = jnp.maximum(state @ w1 + b1, 0.0)
    feat = jnp.maximum(feat @ w2 + b2, 0.0)
    outs, off = [], 0
    for n in output_dims:
        logits = feat @ wh_flat[:, off:off + n] + bh_flat[:, off:off + n]
        outs.append(logits - jax.scipy.special.logsumexp(logits, axis=-1, keepdims=True))
        off += n
    return outs


if __name__ == "__main__":
    input_dim = 16
    output_dims = (4, 6, 3)

    key = jax.random.PRNGKey(0)
    k_state, k_params, k_state2 = jax.random.split(key, 3)
    params = init_params(k_params, input_dim, output_dims)

    # Case 1: tiny batch (single grid step).
    batch = 8
    state = jax.random.normal(k_state, (batch, input_dim), jnp.float32)
    outs = jax.block_until_ready(
        multi_dimensional_actor_forward(state, params, output_dims))
    refs = _reference_forward(state, params, output_dims)
    for o, r in zip(outs, refs):
        assert o.shape == r.shape
        assert jnp.max(jnp.abs(o - r)) < 1e-4

    # Case 2: batch that exercises the >=2-grid-step (megacore) split and batch padding.
    batch2 = 50
    state2 = jax.random.normal(k_state2, (batch2, input_dim), jnp.float32)
    outs2 = jax.block_until_ready(
        multi_dimensional_actor_forward(state2, params, output_dims))
    refs2 = _reference_forward(state2, params, output_dims)
    for o, r in zip(outs2, refs2):
        assert o.shape == r.shape
        assert jnp.max(jnp.abs(o - r)) < 1e-4

    print("KERNEL_OK")
</pallas_src>

<mosaic_0001>
module attributes {stable_mosaic.version = 11 : i64} {
  func.func @kernel(%arg0: i32, %arg1: memref<8x16xf32, #tpu.memory_space<vmem>>, %arg2: memref<16x128xf32, #tpu.memory_space<vmem>>, %arg3: memref<1x128xf32, #tpu.memory_space<vmem>>, %arg4: memref<128x128xf32, #tpu.memory_space<vmem>>, %arg5: memref<1x128xf32, #tpu.memory_space<vmem>>, %arg6: memref<128x128xf32, #tpu.memory_space<vmem>>, %arg7: memref<1x128xf32, #tpu.memory_space<vmem>>, %arg8: memref<8x13xf32, #tpu.memory_space<vmem>>) attributes {dimension_semantics = [#tpu.dimension_semantics<parallel>], iteration_bounds = array<i64: 1>, scalar_prefetch = 0 : i64, scratch_operands = 0 : i64, tpu.core_type = #tpu.core_type<tc>, window_params = [{transform_indices = @transform_0, window_bounds = array<i64: 8, 16>}, {pipeline_mode = #tpu.pipeline_mode<synchronous>, transform_indices = @transform_1, window_bounds = array<i64: 16, 128>}, {pipeline_mode = #tpu.pipeline_mode<synchronous>, transform_indices = @transform_2, window_bounds = array<i64: 1, 128>}, {pipeline_mode = #tpu.pipeline_mode<synchronous>, transform_indices = @transform_3, window_bounds = array<i64: 128, 128>}, {pipeline_mode = #tpu.pipeline_mode<synchronous>, transform_indices = @transform_4, window_bounds = array<i64: 1, 128>}, {pipeline_mode = #tpu.pipeline_mode<synchronous>, transform_indices = @transform_5, window_bounds = array<i64: 128, 128>}, {pipeline_mode = #tpu.pipeline_mode<synchronous>, transform_indices = @transform_6, window_bounds = array<i64: 1, 128>}, {transform_indices = @transform_7, window_bounds = array<i64: 8, 13>}]} {
    %c0 = arith.constant 0 : index
    %c0_0 = arith.constant 0 : index
    %0 = vector.load %arg1[%c0, %c0_0] : memref<8x16xf32, #tpu.memory_space<vmem>>, vector<8x16xf32>
    %c0_1 = arith.constant 0 : index
    %c0_2 = arith.constant 0 : index
    %1 = vector.load %arg2[%c0_1, %c0_2] : memref<16x128xf32, #tpu.memory_space<vmem>>, vector<16x128xf32>
    %cst = arith.constant dense<0.000000e+00> : vector<8x128xf32>
    %2 = tpu.matmul %0, %1, %cst {dimension_numbers = #tpu.dot_dimension_numbers<[1], [0], [0], [1], [0, 0, 1, 1], [], []>} : vector<8x16xf32>, vector<16x128xf32>, vector<8x128xf32> -> vector<8x128xf32>
    %c0_3 = arith.constant 0 : index
    %c0_4 = arith.constant 0 : index
    %3 = vector.load %arg3[%c0_3, %c0_4] : memref<1x128xf32, #tpu.memory_space<vmem>>, vector<1x128xf32>
    %4 = vector.broadcast %3 : vector<1x128xf32> to vector<8x128xf32>
    %5 = arith.addf %2, %4 : vector<8x128xf32>
    %cst_5 = arith.constant 0.000000e+00 : f32
    %6 = vector.broadcast %cst_5 : f32 to vector<8x128xf32>
    %7 = arith.maximumf %5, %6 : vector<8x128xf32>
    %c0_6 = arith.constant 0 : index
    %c0_7 = arith.constant 0 : index
    %8 = vector.load %arg4[%c0_6, %c0_7] : memref<128x128xf32, #tpu.memory_space<vmem>>, vector<128x128xf32>
    %cst_8 = arith.constant dense<0.000000e+00> : vector<8x128xf32>
    %9 = tpu.matmul %7, %8, %cst_8 {dimension_numbers = #tpu.dot_dimension_numbers<[1], [0], [0], [1], [0, 0, 1, 1], [], []>} : vector<8x128xf32>, vector<128x128xf32>, vector<8x128xf32> -> vector<8x128xf32>
    %c0_9 = arith.constant 0 : index
    %c0_10 = arith.constant 0 : index
    %10 = vector.load %arg5[%c0_9, %c0_10] : memref<1x128xf32, #tpu.memory_space<vmem>>, vector<1x128xf32>
    %11 = vector.broadcast %10 : vector<1x128xf32> to vector<8x128xf32>
    %12 = arith.addf %9, %11 : vector<8x128xf32>
    %cst_11 = arith.constant 0.000000e+00 : f32
    %13 = vector.broadcast %cst_11 : f32 to vector<8x128xf32>
    %14 = arith.maximumf %12, %13 : vector<8x128xf32>
    %c0_12 = arith.constant 0 : index
    %c0_13 = arith.constant 0 : index
    %15 = vector.load %arg6[%c0_12, %c0_13] : memref<128x128xf32, #tpu.memory_space<vmem>>, vector<128x128xf32>
    %cst_14 = arith.constant dense<0.000000e+00> : vector<8x128xf32>
    %16 = tpu.matmul %14, %15, %cst_14 {dimension_numbers = #tpu.dot_dimension_numbers<[1], [0], [0], [1], [0, 0, 1, 1], [], []>} : vector<8x128xf32>, vector<128x128xf32>, vector<8x128xf32> -> vector<8x128xf32>
    %c0_15 = arith.constant 0 : index
    %c0_16 = arith.constant 0 : index
    %17 = vector.load %arg7[%c0_15, %c0_16] : memref<1x128xf32, #tpu.memory_space<vmem>>, vector<1x128xf32>
    %18 = vector.broadcast %17 : vector<1x128xf32> to vector<8x128xf32>
    %19 = arith.addf %16, %18 : vector<8x128xf32>
    %20 = tpu.iota {dimensions = array<i32: 1>} : vector<1x128xi32>
    %cst_17 = arith.constant 0.000000e+00 : f32
    %21 = vector.broadcast %cst_17 : f32 to vector<8x128xf32>
    %c0_i32 = arith.constant 0 : i32
    %22 = vector.broadcast %c0_i32 : i32 to vector<1x128xi32>
    %23 = arith.cmpi sge, %20, %22 : vector<1x128xi32>
    %c4_i32 = arith.constant 4 : i32
    %24 = vector.broadcast %c4_i32 : i32 to vector<1x128xi32>
    %25 = arith.cmpi slt, %20, %24 : vector<1x128xi32>
    %26 = arith.andi %23, %25 : vector<1x128xi1>
    %cst_18 = arith.constant -1.000000e+30 : f32
    %27 = vector.shape_cast %26 : vector<1x128xi1> to vector<1x128xi1>
    %28 = vector.broadcast %27 : vector<1x128xi1> to vector<8x128xi1>
    %29 = vector.broadcast %cst_18 : f32 to vector<8x128xf32>
    %30 = arith.select %28, %19, %29 : vector<8x128xi1>, vector<8x128xf32>
    %cst_19 = arith.constant dense<0xFF800000> : vector<8xf32>
    %31 = vector.multi_reduction <maximumf>, %30, %cst_19 [1] : vector<8x128xf32> to vector<8xf32>
    %32 = vector.shape_cast %31 : vector<8xf32> to vector<8x1xf32>
    %cst_20 = arith.constant 0.000000e+00 : f32
    %33 = vector.shape_cast %26 : vector<1x128xi1> to vector<1x128xi1>
    %34 = vector.broadcast %33 : vector<1x128xi1> to vector<8x128xi1>
    %35 = vector.shape_cast %32 : vector<8x1xf32> to vector<8x1xf32>
    %36 = vector.broadcast %35 : vector<8x1xf32> to vector<8x128xf32>
    %37 = vector.broadcast %cst_20 : f32 to vector<8x128xf32>
    %38 = arith.select %34, %36, %37 : vector<8x128xi1>, vector<8x128xf32>
    %39 = arith.addf %21, %38 : vector<8x128xf32>
    %c4_i32_21 = arith.constant 4 : i32
    %40 = vector.broadcast %c4_i32_21 : i32 to vector<1x128xi32>
    %41 = arith.cmpi sge, %20, %40 : vector<1x128xi32>
    %c10_i32 = arith.constant 10 : i32
    %42 = vector.broadcast %c10_i32 : i32 to vector<1x128xi32>
    %43 = arith.cmpi slt, %20, %42 : vector<1x128xi32>
    %44 = arith.andi %41, %43 : vector<1x128xi1>
    %cst_22 = arith.constant -1.000000e+30 : f32
    %45 = vector.shape_cast %44 : vector<1x128xi1> to vector<1x128xi1>
    %46 = vector.broadcast %45 : vector<1x128xi1> to vector<8x128xi1>
    %47 = vector.broadcast %cst_22 : f32 to vector<8x128xf32>
    %48 = arith.select %46, %19, %47 : vector<8x128xi1>, vector<8x128xf32>
    %cst_23 = arith.constant dense<0xFF800000> : vector<8xf32>
    %49 = vector.multi_reduction <maximumf>, %48, %cst_23 [1] : vector<8x128xf32> to vector<8xf32>
    %50 = vector.shape_cast %49 : vector<8xf32> to vector<8x1xf32>
    %cst_24 = arith.constant 0.000000e+00 : f32
    %51 = vector.shape_cast %44 : vector<1x128xi1> to vector<1x128xi1>
    %52 = vector.broadcast %51 : vector<1x128xi1> to vector<8x128xi1>
    %53 = vector.shape_cast %50 : vector<8x1xf32> to vector<8x1xf32>
    %54 = vector.broadcast %53 : vector<8x1xf32> to vector<8x128xf32>
    %55 = vector.broadcast %cst_24 : f32 to vector<8x128xf32>
    %56 = arith.select %52, %54, %55 : vector<8x128xi1>, vector<8x128xf32>
    %57 = arith.addf %39, %56 : vector<8x128xf32>
    %c10_i32_25 = arith.constant 10 : i32
    %58 = vector.broadcast %c10_i32_25 : i32 to vector<1x128xi32>
    %59 = arith.cmpi sge, %20, %58 : vector<1x128xi32>
    %c13_i32 = arith.constant 13 : i32
    %60 = vector.broadcast %c13_i32 : i32 to vector<1x128xi32>
    %61 = arith.cmpi slt, %20, %60 : vector<1x128xi32>
    %62 = arith.andi %59, %61 : vector<1x128xi1>
    %cst_26 = arith.constant -1.000000e+30 : f32
    %63 = vector.shape_cast %62 : vector<1x128xi1> to vector<1x128xi1>
    %64 = vector.broadcast %63 : vector<1x128xi1> to vector<8x128xi1>
    %65 = vector.broadcast %cst_26 : f32 to vector<8x128xf32>
    %66 = arith.select %64, %19, %65 : vector<8x128xi1>, vector<8x128xf32>
    %cst_27 = arith.constant dense<0xFF800000> : vector<8xf32>
    %67 = vector.multi_reduction <maximumf>, %66, %cst_27 [1] : vector<8x128xf32> to vector<8xf32>
    %68 = vector.shape_cast %67 : vector<8xf32> to vector<8x1xf32>
    %cst_28 = arith.constant 0.000000e+00 : f32
    %69 = vector.shape_cast %62 : vector<1x128xi1> to vector<1x128xi1>
    %70 = vector.broadcast %69 : vector<1x128xi1> to vector<8x128xi1>
    %71 = vector.shape_cast %68 : vector<8x1xf32> to vector<8x1xf32>
    %72 = vector.broadcast %71 : vector<8x1xf32> to vector<8x128xf32>
    %73 = vector.broadcast %cst_28 : f32 to vector<8x128xf32>
    %74 = arith.select %70, %72, %73 : vector<8x128xi1>, vector<8x128xf32>
    %75 = arith.addf %57, %74 : vector<8x128xf32>
    %76 = arith.subf %19, %75 : vector<8x128xf32>
    %77 = math.exp %76 : vector<8x128xf32>
    %cst_29 = arith.constant 0.000000e+00 : f32
    %78 = vector.broadcast %cst_29 : f32 to vector<8x128xf32>
    %cst_30 = arith.constant 0.000000e+00 : f32
    %79 = vector.shape_cast %26 : vector<1x128xi1> to vector<1x128xi1>
    %80 = vector.broadcast %79 : vector<1x128xi1> to vector<8x128xi1>
    %81 = vector.broadcast %cst_30 : f32 to vector<8x128xf32>
    %82 = arith.select %80, %77, %81 : vector<8x128xi1>, vector<8x128xf32>
    %cst_31 = arith.constant dense<0.000000e+00> : vector<8xf32>
    %83 = vector.multi_reduction <add>, %82, %cst_31 [1] : vector<8x128xf32> to vector<8xf32>
    %84 = vector.shape_cast %83 : vector<8xf32> to vector<8x1xf32>
    %85 = math.log %84 : vector<8x1xf32>
    %cst_32 = arith.constant 0.000000e+00 : f32
    %86 = vector.shape_cast %26 : vector<1x128xi1> to vector<1x128xi1>
    %87 = vector.broadcast %86 : vector<1x128xi1> to vector<8x128xi1>
    %88 = vector.shape_cast %85 : vector<8x1xf32> to vector<8x1xf32>
    %89 = vector.broadcast %88 : vector<8x1xf32> to vector<8x128xf32>
    %90 = vector.broadcast %cst_32 : f32 to vector<8x128xf32>
    %91 = arith.select %87, %89, %90 : vector<8x128xi1>, vector<8x128xf32>
    %92 = arith.addf %78, %91 : vector<8x128xf32>
    %cst_33 = arith.constant 0.000000e+00 : f32
    %93 = vector.shape_cast %44 : vector<1x128xi1> to vector<1x128xi1>
    %94 = vector.broadcast %93 : vector<1x128xi1> to vector<8x128xi1>
    %95 = vector.broadcast %cst_33 : f32 to vector<8x128xf32>
    %96 = arith.select %94, %77, %95 : vector<8x128xi1>, vector<8x128xf32>
    %cst_34 = arith.constant dense<0.000000e+00> : vector<8xf32>
    %97 = vector.multi_reduction <add>, %96, %cst_34 [1] : vector<8x128xf32> to vector<8xf32>
    %98 = vector.shape_cast %97 : vector<8xf32> to vector<8x1xf32>
    %99 = math.log %98 : vector<8x1xf32>
    %cst_35 = arith.constant 0.000000e+00 : f32
    %100 = vector.shape_cast %44 : vector<1x128xi1> to vector<1x128xi1>
    %101 = vector.broadcast %100 : vector<1x128xi1> to vector<8x128xi1>
    %102 = vector.shape_cast %99 : vector<8x1xf32> to vector<8x1xf32>
    %103 = vector.broadcast %102 : vector<8x1xf32> to vector<8x128xf32>
    %104 = vector.broadcast %cst_35 : f32 to vector<8x128xf32>
    %105 = arith.select %101, %103, %104 : vector<8x128xi1>, vector<8x128xf32>
    %106 = arith.addf %92, %105 : vector<8x128xf32>
    %cst_36 = arith.constant 0.000000e+00 : f32
    %107 = vector.shape_cast %62 : vector<1x128xi1> to vector<1x128xi1>
    %108 = vector.broadcast %107 : vector<1x128xi1> to vector<8x128xi1>
    %109 = vector.broadcast %cst_36 : f32 to vector<8x128xf32>
    %110 = arith.select %108, %77, %109 : vector<8x128xi1>, vector<8x128xf32>
    %cst_37 = arith.constant dense<0.000000e+00> : vector<8xf32>
    %111 = vector.multi_reduction <add>, %110, %cst_37 [1] : vector<8x128xf32> to vector<8xf32>
    %112 = vector.shape_cast %111 : vector<8xf32> to vector<8x1xf32>
    %113 = math.log %112 : vector<8x1xf32>
    %cst_38 = arith.constant 0.000000e+00 : f32
    %114 = vector.shape_cast %62 : vector<1x128xi1> to vector<1x128xi1>
    %115 = vector.broadcast %114 : vector<1x128xi1> to vector<8x128xi1>
    %116 = vector.shape_cast %113 : vector<8x1xf32> to vector<8x1xf32>
    %117 = vector.broadcast %116 : vector<8x1xf32> to vector<8x128xf32>
    %118 = vector.broadcast %cst_38 : f32 to vector<8x128xf32>
    %119 = arith.select %115, %117, %118 : vector<8x128xi1>, vector<8x128xf32>
    %120 = arith.addf %106, %119 : vector<8x128xf32>
    %121 = arith.subf %19, %75 : vector<8x128xf32>
    %122 = arith.subf %121, %120 : vector<8x128xf32>
    %123 = vector.extract_strided_slice %122 {offsets = [0, 0], sizes = [8, 13], strides = [1, 1]} : vector<8x128xf32> to vector<8x13xf32>
    %c0_39 = arith.constant 0 : index
    %c0_40 = arith.constant 0 : index
    %124 = vector.load %arg8[%c0_39, %c0_40] : memref<8x13xf32, #tpu.memory_space<vmem>>, vector<8x13xf32>
    tpu.vector_store %arg8[%c0_39, %c0_40], %123 {strides = array<i32>} : memref<8x13xf32, #tpu.memory_space<vmem>>, vector<8x13xf32>,
    return
  }
  func.func @transform_0(%arg0: i32) -> (i32, i32) {
    %c0_i32 = arith.constant 0 : i32
    %c0_i32_0 = arith.constant 0 : i32
    return %arg0, %c0_i32 : i32, i32
  }
  func.func @transform_1(%arg0: i32) -> (i32, i32) {
    %c0_i32 = arith.constant 0 : i32
    %c0_i32_0 = arith.constant 0 : i32
    %c0_i32_1 = arith.constant 0 : i32
    return %c0_i32, %c0_i32_0 : i32, i32
  }
  func.func @transform_2(%arg0: i32) -> (i32, i32) {
    %c0_i32 = arith.constant 0 : i32
    %c0_i32_0 = arith.constant 0 : i32
    %c0_i32_1 = arith.constant 0 : i32
    return %c0_i32, %c0_i32_0 : i32, i32
  }
  func.func @transform_3(%arg0: i32) -> (i32, i32) {
    %c0_i32 = arith.constant 0 : i32
    %c0_i32_0 = arith.constant 0 : i32
    %c0_i32_1 = arith.constant 0 : i32
    return %c0_i32, %c0_i32_0 : i32, i32
  }
  func.func @transform_4(%arg0: i32) -> (i32, i32) {
    %c0_i32 = arith.constant 0 : i32
    %c0_i32_0 = arith.constant 0 : i32
    %c0_i32_1 = arith.constant 0 : i32
    return %c0_i32, %c0_i32_0 : i32, i32
  }
  func.func @transform_5(%arg0: i32) -> (i32, i32) {
    %c0_i32 = arith.constant 0 : i32
    %c0_i32_0 = arith.constant 0 : i32
    %c0_i32_1 = arith.constant 0 : i32
    return %c0_i32, %c0_i32_0 : i32, i32
  }
  func.func @transform_6(%arg0: i32) -> (i32, i32) {
    %c0_i32 = arith.constant 0 : i32
    %c0_i32_0 = arith.constant 0 : i32
    %c0_i32_1 = arith.constant 0 : i32
    return %c0_i32, %c0_i32_0 : i32, i32
  }
  func.func @transform_7(%arg0: i32) -> (i32, i32) {
    %c0_i32 = arith.constant 0 : i32
    %c0_i32_0 = arith.constant 0 : i32
    return %arg0, %c0_i32 : i32, i32
  }
}

</mosaic_0001>

<llo_original>
// kernel: tpu_custom_call.1
$region0: #{tpu_custom_call.1}
  #allocation0 [shape = 'u32[]', space=smem, size = 0x4, offset = 0x4, fixed_abs, tag = 'smem constant byte address 0x4 - core index']
  #allocation1 [shape = 'u32[144,128]{1,0:T(1,128)}', space=vmem, size = 0x12000, scoped, tag = 'internal scratch']
  %s0 = inlined_call_operand.hbm [shape: f32[8,16], index: 0, kind: input, shape index: {}]
  %s1 = inlined_call_operand.hbm [shape: f32[16,128], index: 1, kind: input, shape index: {}]
  %s2 = inlined_call_operand.vmem [shape: f32[1,128], index: 2, kind: input, shape index: {}]
  %s3 = inlined_call_operand.hbm [shape: f32[128,128], index: 3, kind: input, shape index: {}]
  %s4 = inlined_call_operand.vmem [shape: f32[1,128], index: 4, kind: input, shape index: {}]
  %s5 = inlined_call_operand.hbm [shape: f32[128,128], index: 5, kind: input, shape index: {}]
  %s6 = inlined_call_operand.vmem [shape: f32[1,128], index: 6, kind: input, shape index: {}]
  %s7 = inlined_call_operand.hbm [shape: f32[8,13], index: 7, kind: output, shape index: {}]
  %s8 = sld [smem:[#allocation0]]
  $region54: #{tpu_custom_call.1} parent=0
    _
  %s10 = ssub.s32 1, %s8
  %s11 = scalar_select 0, %s10, %s8
  $region1: #{tpu_custom_call.1} parent=0
    #allocation2 [shape = 'u8[4096]{0}', space=vmem, size = 0x1000, scoped, tag = 'input window, operand 0, single buffered']
    #allocation3 [shape = 's32[1]{0}', space=sflag, size = 0x4, scoped, tag = 'scoped memory for tpu_custom_call.1']
    #allocation4 [shape = 's32[1]{0}', space=sflag, size = 0x4, scoped, tag = 'scoped memory for tpu_custom_call.1']
    #allocation5 [shape = 'u8[8192]{0}', space=vmem, size = 0x2000, scoped, tag = 'input window, operand 1, single buffered']
    #allocation6 [shape = 's32[1]{0}', space=sflag, size = 0x4, scoped, tag = 'scoped memory for tpu_custom_call.1']
    #allocation7 [shape = 'u8[65536]{0}', space=vmem, size = 0x10000, scoped, tag = 'input window, operand 3, single buffered']
    #allocation8 [shape = 'u8[65536]{0}', space=vmem, size = 0x10000, scoped, tag = 'input window, operand 5, single buffered']
    #allocation9 [shape = 's32[1]{0}', space=sflag, size = 0x4, scoped, tag = 'scoped memory for tpu_custom_call.1']
    #allocation10 [shape = 'u8[4096]{0}', space=vmem, size = 0x1000, scoped, tag = 'output window, operand 0, single buffered']
    %12 = vsyncpa [#allocation3], 0
    %13 = vsyncpa [#allocation6], 0
    %14 = vsyncpa [#allocation9], 0
    %15 = vsyncpa [#allocation4], 0
    // Predicated region
    $region2: #{tpu_custom_call.1} parent=1 // pred_check
      _
    $region3: #{tpu_custom_call.1} parent=1 // pred_check_branch
      %17 = sbr.rel (0) target = $region5
    $region4: #{tpu_custom_call.1} parent=1 // pred_region
      %s19 = ssub.s32 128, 128
      %20 = vsyncadd [#allocation3], %s19
      %s22 = sshll.u32 [#allocation2], 4
      %s23 = int_to_ptr.vmem [resolvable:$true] %s22
      %25 = dma.hbm_to_vmem [thread:$0]  %s0, 128, %s23, [#allocation3]
    $region5: #{tpu_custom_call.1} parent=1 // pred_fallthru
      _
    // Predicated region
    $region6: #{tpu_custom_call.1} parent=1 // pred_check
      _
    $region7: #{tpu_custom_call.1} parent=1 // pred_check_branch
      %27 = sbr.rel (0) target = $region9
    $region8: #{tpu_custom_call.1} parent=1 // pred_region
      %s29 = ssub.s32 256, 256
      %30 = vsyncadd [#allocation6], %s29
      %s31 = sshll.u32 [#allocation5], 4
      %s32 = int_to_ptr.vmem [resolvable:$true] %s31
      %37 = dma.hbm_to_vmem [thread:$0]  %s1, 256, %s32, [#allocation6], 128, 128, 8
    $region9: #{tpu_custom_call.1} parent=1 // pred_fallthru
      _
    // Predicated region
    $region10: #{tpu_custom_call.1} parent=1 // pred_check
      _
    $region11: #{tpu_custom_call.1} parent=1 // pred_check_branch
      %39 = sbr.rel (0) target = $region13
    $region12: #{tpu_custom_call.1} parent=1 // pred_region
      _
    $region13: #{tpu_custom_call.1} parent=1 // pred_fallthru
      _
    // Predicated region
    $region14: #{tpu_custom_call.1} parent=1 // pred_check
      _
    $region15: #{tpu_custom_call.1} parent=1 // pred_check_branch
      %41 = sbr.rel (0) target = $region17
    $region16: #{tpu_custom_call.1} parent=1 // pred_region
      %s43 = ssub.s32 2048, 2048
      %44 = vsyncadd [#allocation6], %s43
      %s45 = sshll.u32 [#allocation7], 4
      %s46 = int_to_ptr.vmem [resolvable:$true] %s45
      %51 = dma.hbm_to_vmem [thread:$0]  %s3, 2048, %s46, [#allocation6], 128, 128, 8
    $region17: #{tpu_custom_call.1} parent=1 // pred_fallthru
      _
    // Predicated region
    $region18: #{tpu_custom_call.1} parent=1 // pred_check
      _
    $region19: #{tpu_custom_call.1} parent=1 // pred_check_branch
      %53 = sbr.rel (0) target = $region21
    $region20: #{tpu_custom_call.1} parent=1 // pred_region
      _
    $region21: #{tpu_custom_call.1} parent=1 // pred_fallthru
      _
    // Predicated region
    $region22: #{tpu_custom_call.1} parent=1 // pred_check
      _
    $region23: #{tpu_custom_call.1} parent=1 // pred_check_branch
      %55 = sbr.rel (0) target = $region25
    $region24: #{tpu_custom_call.1} parent=1 // pred_region
      %s57 = ssub.s32 2048, 2048
      %58 = vsyncadd [#allocation9], %s57
      %s59 = sshll.u32 [#allocation8], 4
      %s60 = int_to_ptr.vmem [resolvable:$true] %s59
      %65 = dma.hbm_to_vmem [thread:$0]  %s5, 2048, %s60, [#allocation9], 128, 128, 8
    $region25: #{tpu_custom_call.1} parent=1 // pred_fallthru
      _
    // Predicated region
    $region26: #{tpu_custom_call.1} parent=1 // pred_check
      _
    $region27: #{tpu_custom_call.1} parent=1 // pred_check_branch
      %67 = sbr.rel (0) target = $region29
    $region28: #{tpu_custom_call.1} parent=1 // pred_region
      _
    $region29: #{tpu_custom_call.1} parent=1 // pred_fallthru
      _
    // Predicated region
    $region30: #{tpu_custom_call.1} parent=1 // pred_check
      _
    $region31: #{tpu_custom_call.1} parent=1 // pred_check_branch
      %69 = sbr.rel (0) target = $region33
    $region32: #{tpu_custom_call.1} parent=1 // pred_region
      %70 = dma.done [#allocation3], 128
    $region33: #{tpu_custom_call.1} parent=1 // pred_fallthru
      _
    // Predicated region
    $region34: #{tpu_custom_call.1} parent=1 // pred_check
      _
    $region35: #{tpu_custom_call.1} parent=1 // pred_check_branch
      %72 = sbr.rel (0) target = $region37
    $region36: #{tpu_custom_call.1} parent=1 // pred_region
      %73 = dma.done [#allocation6], 256
    $region37: #{tpu_custom_call.1} parent=1 // pred_fallthru
      _
    // Predicated region
    $region38: #{tpu_custom_call.1} parent=1 // pred_check
      _
    $region39: #{tpu_custom_call.1} parent=1 // pred_check_branch
      %75 = sbr.rel (0) target = $region41
    $region40: #{tpu_custom_call.1} parent=1 // pred_region
      %76 = dma.done [#allocation6], 2048
    $region41: #{tpu_custom_call.1} parent=1 // pred_fallthru
      _
    // Predicated region
    $region42: #{tpu_custom_call.1} parent=1 // pred_check
      _
    $region43: #{tpu_custom_call.1} parent=1 // pred_check_branch
      %78 = sbr.rel (0) target = $region45
    $region44: #{tpu_custom_call.1} parent=1 // pred_region
      %79 = dma.done [#allocation9], 2048
    $region45: #{tpu_custom_call.1} parent=1 // pred_fallthru
      _
    %v80 = vld [vmem:[#allocation2] sm:$0xff]
    %v81 = vld [vmem:[#allocation5] sm:$0xff]
    %v82 = vld [vmem:[#allocation5 + $0x8] sm:$0xff]
    %v83 = vld [vmem:[%s2] sm:$0x1]
    %v85 = vlaneseq
    %v86 = vshrl.u32 %v85, 7
    %v87 = vsub.s32 0, %v86
    %v88 = vrot.slane %v83, %v87
    %vm90 = vcmask 130048
    %v92 = vsel %vm90, %v80, 0
    %94 = vmatprep.subr.mxu0 0.0
    %95 = vmatpush1.msra.mxu0 0.0
    %96 = vmatprep.subr.mxu0 0.0
    %97 = vmatpush1.msra.mxu0 0.0
    %98 = vmatprep.subr.mxu0 0.0
    %99 = vmatpush1.msra.mxu0 0.0
    %100 = vmatprep.subr.mxu0 0.0
    %101 = vmatpush1.msra.mxu0 0.0
    %102 = vmatprep.subr.mxu0 0.0
    %103 = vmatpush1.msra.mxu0 0.0
    %104 = vmatprep.subr.mxu0 0.0
    %105 = vmatpush1.msra.mxu0 0.0
    %106 = vmatprep.subr.mxu0 0.0
    %107 = vmatpush1.msra.mxu0 0.0
    %108 = vmatprep.subr.mxu0 0.0
    %109 = vmatpush1.msra.mxu0 0.0
    %110 = vmatprep.subr.mxu0 0.0
    %111 = vmatpush1.msra.mxu0 0.0
    %112 = vmatprep.subr.mxu0 0.0
    %113 = vmatpush1.msra.mxu0 0.0
    %114 = vmatprep.subr.mxu0 0.0
    %115 = vmatpush1.msra.mxu0 0.0
    %116 = vmatprep.subr.mxu0 0.0
    %117 = vmatpush1.msra.mxu0 0.0
    %118 = vmatprep.subr.mxu0 0.0
    %119 = vmatpush1.msra.mxu0 0.0
    %120 = vmatprep.subr.mxu0 0.0
    %121 = vmatpush1.msra.mxu0 0.0
    %122 = vmatprep.subr.mxu0 0.0
    %123 = vmatpush1.msra.mxu0 %v82
    %124 = vmatprep.subr.mxu0 0.0
    %125 = vmatpush1.msra.mxu0 %v81
    %126 = vmatprep.subr.mxu0 0.0
    %127 = vmatpush2.msra.mxu0 0.0
    %128 = vmatprep.subr.mxu0 0.0
    %129 = vmatpush2.msra.mxu0 0.0
    %130 = vmatprep.subr.mxu0 0.0
    %131 = vmatpush2.msra.mxu0 0.0
    %132 = vmatprep.subr.mxu0 0.0
    %133 = vmatpush2.msra.mxu0 0.0
    %134 = vmatprep.subr.mxu0 0.0
    %135 = vmatpush2.msra.mxu0 0.0
    %136 = vmatprep.subr.mxu0 0.0
    %137 = vmatpush2.msra.mxu0 0.0
    %138 = vmatprep.subr.mxu0 0.0
    %139 = vmatpush2.msra.mxu0 0.0
    %140 = vmatprep.subr.mxu0 0.0
    %141 = vmatpush2.msra.mxu0 0.0
    %142 = vmatprep.subr.mxu0 0.0
    %143 = vmatpush2.msra.mxu0 0.0
    %144 = vmatprep.subr.mxu0 0.0
    %145 = vmatpush2.msra.mxu0 0.0
    %146 = vmatprep.subr.mxu0 0.0
    %147 = vmatpush2.msra.mxu0 0.0
    %148 = vmatprep.subr.mxu0 0.0
    %149 = vmatpush2.msra.mxu0 0.0
    %150 = vmatprep.subr.mxu0 0.0
    %151 = vmatpush2.msra.mxu0 0.0
    %152 = vmatprep.subr.mxu0 0.0
    %153 = vmatpush2.msra.mxu0 0.0
    %154 = vmatprep.subr.mxu0 0.0
    %155 = vmatpush2.msra.mxu0 0.0
    %156 = vmatprep.subr.mxu0 0.0
    %157 = vmatpush2.msra.mxu0 0.0
    %158 = vmatprep.mubr.f32.mxu0 0.0
    %159 = vmatmul.mubr.f32.gmra.mxu0 %v92
    %v160 = vpop.f32.mrf.mxu0
    %v161 = vadd.f32 %v88, %v160
    %v162 = vpop.f32.mrf.mxu0
    %163 = vdwg.mxu0
    %v164 = vmax.f32 %v161, 0.0
    %v165 = vld [vmem:[#allocation7] sm:$0xff]
    %v166 = vld [vmem:[#allocation7 + $0x8] sm:$0xff]
    %v167 = vld [vmem:[#allocation7 + $0x10] sm:$0xff]
    %v168 = vld [vmem:[#allocation7 + $0x18] sm:$0xff]
    %v169 = vld [vmem:[#allocation7 + $0x20] sm:$0xff]
    %v170 = vld [vmem:[#allocation7 + $0x28] sm:$0xff]
    %v171 = vld [vmem:[#allocation7 + $0x30] sm:$0xff]
    %v172 = vld [vmem:[#allocation7 + $0x38] sm:$0xff]
    %v173 = vld [vmem:[#allocation7 + $0x40] sm:$0xff]
    %v174 = vld [vmem:[#allocation7 + $0x48] sm:$0xff]
    %v175 = vld [vmem:[#allocation7 + $0x50] sm:$0xff]
    %v176 = vld [vmem:[#allocation7 + $0x58] sm:$0xff]
    %v177 = vld [vmem:[#allocation7 + $0x60] sm:$0xff]
    %v178 = vld [vmem:[#allocation7 + $0x68] sm:$0xff]
    %v179 = vld [vmem:[#allocation7 + $0x70] sm:$0xff]
    %v180 = vld [vmem:[#allocation7 + $0x78] sm:$0xff]
    %v181 = vld [vmem:[%s4] sm:$0x1]
    %v183 = vlaneseq
    %v184 = vshrl.u32 %v183, 7
    %v185 = vsub.s32 0, %v184
    %v186 = vrot.slane %v181, %v185
    %188 = vmatprep.subr.mxu0 0.0
    %189 = vmatpush1.msra.mxu0 %v180
    %190 = vmatprep.subr.mxu0 0.0
    %191 = vmatpush1.msra.mxu0 %v179
    %192 = vmatprep.subr.mxu0 0.0
    %193 = vmatpush1.msra.mxu0 %v178
    %194 = vmatprep.subr.mxu0 0.0
    %195 = vmatpush1.msra.mxu0 %v177
    %196 = vmatprep.subr.mxu0 0.0
    %197 = vmatpush1.msra.mxu0 %v176
    %198 = vmatprep.subr.mxu0 0.0
    %199 = vmatpush1.msra.mxu0 %v175
    %200 = vmatprep.subr.mxu0 0.0
    %201 = vmatpush1.msra.mxu0 %v174
    %202 = vmatprep.subr.mxu0 0.0
    %203 = vmatpush1.msra.mxu0 %v173
    %204 = vmatprep.subr.mxu0 0.0
    %205 = vmatpush1.msra.mxu0 %v172
    %206 = vmatprep.subr.mxu0 0.0
    %207 = vmatpush1.msra.mxu0 %v171
    %208 = vmatprep.subr.mxu0 0.0
    %209 = vmatpush1.msra.mxu0 %v170
    %210 = vmatprep.subr.mxu0 0.0
    %211 = vmatpush1.msra.mxu0 %v169
    %212 = vmatprep.subr.mxu0 0.0
    %213 = vmatpush1.msra.mxu0 %v168
    %214 = vmatprep.subr.mxu0 0.0
    %215 = vmatpush1.msra.mxu0 %v167
    %216 = vmatprep.subr.mxu0 0.0
    %217 = vmatpush1.msra.mxu0 %v166
    %218 = vmatprep.subr.mxu0 0.0
    %219 = vmatpush1.msra.mxu0 %v165
    %220 = vmatprep.subr.mxu0 0.0
    %221 = vmatpush2.msra.mxu0 0.0
    %222 = vmatprep.subr.mxu0 0.0
    %223 = vmatpush2.msra.mxu0 0.0
    %224 = vmatprep.subr.mxu0 0.0
    %225 = vmatpush2.msra.mxu0 0.0
    %226 = vmatprep.subr.mxu0 0.0
    %227 = vmatpush2.msra.mxu0 0.0
    %228 = vmatprep.subr.mxu0 0.0
    %229 = vmatpush2.msra.mxu0 0.0
    %230 = vmatprep.subr.mxu0 0.0
    %231 = vmatpush2.msra.mxu0 0.0
    %232 = vmatprep.subr.mxu0 0.0
    %233 = vmatpush2.msra.mxu0 0.0
    %234 = vmatprep.subr.mxu0 0.0
    %235 = vmatpush2.msra.mxu0 0.0
    %236 = vmatprep.subr.mxu0 0.0
    %237 = vmatpush2.msra.mxu0 0.0
    %238 = vmatprep.subr.mxu0 0.0
    %239 = vmatpush2.msra.mxu0 0.0
    %240 = vmatprep.subr.mxu0 0.0
    %241 = vmatpush2.msra.mxu0 0.0
    %242 = vmatprep.subr.mxu0 0.0
    %243 = vmatpush2.msra.mxu0 0.0
    %244 = vmatprep.subr.mxu0 0.0
    %245 = vmatpush2.msra.mxu0 0.0
    %246 = vmatprep.subr.mxu0 0.0
    %247 = vmatpush2.msra.mxu0 0.0
    %248 = vmatprep.subr.mxu0 0.0
    %249 = vmatpush2.msra.mxu0 0.0
    %250 = vmatprep.subr.mxu0 0.0
    %251 = vmatpush2.msra.mxu0 0.0
    %252 = vmatprep.mubr.f32.mxu0 0.0
    %253 = vmatmul.mubr.f32.gmra.mxu0 %v164
    %v254 = vpop.f32.mrf.mxu0
    %v255 = vadd.f32 %v186, %v254
    %v256 = vpop.f32.mrf.mxu0
    %257 = vdwg.mxu0
    %v258 = vmax.f32 %v255, 0.0
    %v259 = vld [vmem:[#allocation8] sm:$0xff]
    %v260 = vld [vmem:[#allocation8 + $0x8] sm:$0xff]
    %v261 = vld [vmem:[#allocation8 + $0x10] sm:$0xff]
    %v262 = vld [vmem:[#allocation8 + $0x18] sm:$0xff]
    %v263 = vld [vmem:[#allocation8 + $0x20] sm:$0xff]
    %v264 = vld [vmem:[#allocation8 + $0x28] sm:$0xff]
    %v265 = vld [vmem:[#allocation8 + $0x30] sm:$0xff]
    %v266 = vld [vmem:[#allocation8 + $0x38] sm:$0xff]
    %v267 = vld [vmem:[#allocation8 + $0x40] sm:$0xff]
    %v268 = vld [vmem:[#allocation8 + $0x48] sm:$0xff]
    %v269 = vld [vmem:[#allocation8 + $0x50] sm:$0xff]
    %v270 = vld [vmem:[#allocation8 + $0x58] sm:$0xff]
    %v271 = vld [vmem:[#allocation8 + $0x60] sm:$0xff]
    %v272 = vld [vmem:[#allocation8 + $0x68] sm:$0xff]
    %v273 = vld [vmem:[#allocation8 + $0x70] sm:$0xff]
    %v274 = vld [vmem:[#allocation8 + $0x78] sm:$0xff]
    %v275 = vld [vmem:[%s6] sm:$0x1]
    %v277 = vlaneseq
    %v278 = vshrl.u32 %v277, 7
    %v279 = vsub.s32 0, %v278
    %v280 = vrot.slane %v275, %v279
    %282 = vmatprep.subr.mxu0 0.0
    %283 = vmatpush1.msra.mxu0 %v274
    %284 = vmatprep.subr.mxu0 0.0
    %285 = vmatpush1.msra.mxu0 %v273
    %286 = vmatprep.subr.mxu0 0.0
    %287 = vmatpush1.msra.mxu0 %v272
    %288 = vmatprep.subr.mxu0 0.0
    %289 = vmatpush1.msra.mxu0 %v271
    %290 = vmatprep.subr.mxu0 0.0
    %291 = vmatpush1.msra.mxu0 %v270
    %292 = vmatprep.subr.mxu0 0.0
    %293 = vmatpush1.msra.mxu0 %v269
    %294 = vmatprep.subr.mxu0 0.0
    %295 = vmatpush1.msra.mxu0 %v268
    %296 = vmatprep.subr.mxu0 0.0
    %297 = vmatpush1.msra.mxu0 %v267
    %298 = vmatprep.subr.mxu0 0.0
    %299 = vmatpush1.msra.mxu0 %v266
    %300 = vmatprep.subr.mxu0 0.0
    %301 = vmatpush1.msra.mxu0 %v265
    %302 = vmatprep.subr.mxu0 0.0
    %303 = vmatpush1.msra.mxu0 %v264
    %304 = vmatprep.subr.mxu0 0.0
    %305 = vmatpush1.msra.mxu0 %v263
    %306 = vmatprep.subr.mxu0 0.0
    %307 = vmatpush1.msra.mxu0 %v262
    %308 = vmatprep.subr.mxu0 0.0
    %309 = vmatpush1.msra.mxu0 %v261
    %310 = vmatprep.subr.mxu0 0.0
    %311 = vmatpush1.msra.mxu0 %v260
    %312 = vmatprep.subr.mxu0 0.0
    %313 = vmatpush1.msra.mxu0 %v259
    %314 = vmatprep.subr.mxu0 0.0
    %315 = vmatpush2.msra.mxu0 0.0
    %316 = vmatprep.subr.mxu0 0.0
    %317 = vmatpush2.msra.mxu0 0.0
    %318 = vmatprep.subr.mxu0 0.0
    %319 = vmatpush2.msra.mxu0 0.0
    %320 = vmatprep.subr.mxu0 0.0
    %321 = vmatpush2.msra.mxu0 0.0
    %322 = vmatprep.subr.mxu0 0.0
    %323 = vmatpush2.msra.mxu0 0.0
    %324 = vmatprep.subr.mxu0 0.0
    %325 = vmatpush2.msra.mxu0 0.0
    %326 = vmatprep.subr.mxu0 0.0
    %327 = vmatpush2.msra.mxu0 0.0
    %328 = vmatprep.subr.mxu0 0.0
    %329 = vmatpush2.msra.mxu0 0.0
    %330 = vmatprep.subr.mxu0 0.0
    %331 = vmatpush2.msra.mxu0 0.0
    %332 = vmatprep.subr.mxu0 0.0
    %333 = vmatpush2.msra.mxu0 0.0
    %334 = vmatprep.subr.mxu0 0.0
    %335 = vmatpush2.msra.mxu0 0.0
    %336 = vmatprep.subr.mxu0 0.0
    %337 = vmatpush2.msra.mxu0 0.0
    %338 = vmatprep.subr.mxu0 0.0
    %339 = vmatpush2.msra.mxu0 0.0
    %340 = vmatprep.subr.mxu0 0.0
    %341 = vmatpush2.msra.mxu0 0.0
    %342 = vmatprep.subr.mxu0 0.0
    %343 = vmatpush2.msra.mxu0 0.0
    %344 = vmatprep.subr.mxu0 0.0
    %345 = vmatpush2.msra.mxu0 0.0
    %346 = vmatprep.mubr.f32.mxu0 0.0
    %347 = vmatmul.mubr.f32.gmra.mxu0 %v258
    %v348 = vpop.f32.mrf.mxu0
    %v349 = vadd.f32 %v280, %v348
    %v350 = vpop.f32.mrf.mxu0
    %351 = vdwg.mxu0
    %v352 = vlaneseq
    %v353 = vand.u32 %v352, 127
    %vm354 = vcmp.ge.s32.totalorder %v353, 0
    %vm355 = vcmp.lt.s32.totalorder %v353, 4
    %vm356 = vmand %vm354, %vm355
    %v357 = vsel %vm356, 1, 0
    %vm358 = vcmp.eq.s32.totalorder %v357, 1
    %v359 = vsel %vm358, %v349, -1e+30
    %360 = vmax.xlane.f32.xlu0 %v359
    %v361 = vpop.xlane.xlu0 %360
    %v362 = vsel %vm358, %v361, 0.0
    %v363 = vadd.f32 %v362, 0.0
    %vm364 = vcmp.ge.s32.totalorder %v353, 4
    %vm365 = vcmp.lt.s32.totalorder %v353, 10
    %vm366 = vmand %vm364, %vm365
    %v367 = vsel %vm366, 1, 0
    %vm368 = vcmp.eq.s32.totalorder %v367, 1
    %v369 = vsel %vm368, %v349, -1e+30
    %370 = vmax.xlane.f32.xlu0 %v369
    %v371 = vpop.xlane.xlu0 %370
    %v372 = vsel %vm368, %v371, 0.0
    %v373 = vadd.f32 %v363, %v372
    %vm374 = vcmp.ge.s32.totalorder %v353, 10
    %vm375 = vcmp.lt.s32.totalorder %v353, 13
    %vm376 = vmand %vm374, %vm375
    %v377 = vsel %vm376, 1, 0
    %vm378 = vcmp.eq.s32.totalorder %v377, 1
    %v379 = vsel %vm378, %v349, -1e+30
    %380 = vmax.xlane.f32.xlu0 %v379
    %v381 = vpop.xlane.xlu0 %380
    %v382 = vsel %vm378, %v381, 0.0
    %v383 = vadd.f32 %v373, %v382
    %v384 = vsub.f32 %v349, %v383
    %v385 = vmul.f32 %v384, 1.442695
    %v386 = vpow.pop %v385
    %v387 = vsel %vm358, %v386, 0.0
    %388 = vadd.xlane.f32.xlu0 %v387
    %v389 = vpop.xlane.xlu0 %388
    %v390 = vlog2.pop %v389
    %v391 = vmul.f32 %v390, 0.6931472
    %v392 = vsel %vm358, %v391, 0.0
    %v393 = vadd.f32 %v392, 0.0
    %v394 = vsel %vm368, %v386, 0.0
    %395 = vadd.xlane.f32.xlu0 %v394
    %v396 = vpop.xlane.xlu0 %395
    %v397 = vlog2.pop %v396
    %v398 = vmul.f32 %v397, 0.6931472
    %v399 = vsel %vm368, %v398, 0.0
    %v400 = vadd.f32 %v393, %v399
    %v401 = vsel %vm378, %v386, 0.0
    %402 = vadd.xlane.f32.xlu0 %v401
    %v403 = vpop.xlane.xlu0 %402
    %v404 = vlog2.pop %v403
    %v405 = vmul.f32 %v404, 0.6931472
    %v406 = vsel %vm378, %v405, 0.0
    %v407 = vadd.f32 %v400, %v406
    %v408 = vsub.f32 %v384, %v407
    %vm409 = vcmask 105472
    %410 = vst.msk [vmem:[#allocation10] sm:$0xff] %vm409, %v408
    // Predicated region
    $region46: #{tpu_custom_call.1} parent=1 // pred_check
      _
    $region47: #{tpu_custom_call.1} parent=1 // pred_check_branch
      %412 = sbr.rel (0) target = $region49
    $region48: #{tpu_custom_call.1} parent=1 // pred_region
      %s414 = ssub.s32 128, 128
      %415 = vsyncadd [#allocation4], %s414
      %s417 = sshll.u32 [#allocation10], 4
      %s418 = int_to_ptr.vmem [resolvable:$true] %s417
      %420 = dma.vmem_to_hbm [thread:$0]  %s418, 128, %s7, [#allocation4]
    $region49: #{tpu_custom_call.1} parent=1 // pred_fallthru
      _
    // Predicated region
    $region50: #{tpu_custom_call.1} parent=1 // pred_check
      _
    $region51: #{tpu_custom_call.1} parent=1 // pred_check_branch
      %422 = sbr.rel (0) target = $region53
    $region52: #{tpu_custom_call.1} parent=1 // pred_region
      %423 = dma.done [#allocation4], 128
    $region53: #{tpu_custom_call.1} parent=1 // pred_fallthru
      _
    %424 = vsyncpa [#allocation3], 1
    %425 = vsyncpa [#allocation6], 1
    %426 = vsyncpa [#allocation9], 1
    %427 = vsyncpa [#allocation4], 1

</llo_original>
